<compile_context>
chip_gen: v7x
topology: tpu7x:2x2x1
jax: 0.10.0
libtpu: 0.0.40
codegen_flags: <defaults>
</compile_context>

<pallas_src>
import functools

import jax
import jax.numpy as jnp
from jax.experimental import pallas as pl
from jax.experimental.pallas import tpu as pltpu


def _label_smooth_kernel(x_ref, tgt_ref, loss_ref, *, smoothing):
    """One row-tile: writes per-row smoothed-CE loss to loss_ref (rt, 1)."""
    x = x_ref[...].astype(jnp.float32)                        # (rt, C) f32 math in VMEM
    C = x.shape[-1]
    tgt = tgt_ref[...]                                        # (rt, 1) int32

    # Numerically-stable logsumexp along the lane (class) axis.
    m = jnp.max(x, axis=-1, keepdims=True)                    # (rt, 1)
    lse = jnp.log(jnp.sum(jnp.exp(x - m), axis=-1, keepdims=True))

    # Gather x[target] via iota + compare (the scatter_ of the torch module).
    col = jax.lax.broadcasted_iota(jnp.int32, x.shape, 1)     # (rt, C)
    x_tgt = jnp.sum(jnp.where(col == tgt, x, 0.0), axis=-1, keepdims=True)
    x_sum = jnp.sum(x, axis=-1, keepdims=True)

    off = jnp.float32(smoothing / (C - 1.0))
    on_minus_off = jnp.float32((1.0 - smoothing) - smoothing / (C - 1.0))

    # sum_c(weight) == 1  =>
    #   loss_row = sum_c(-weight * (x - m - lse))
    #            = (m + lse) - (off * sum_c(x) + (on - off) * x_target)
    loss_ref[...] = (m + lse) - (off * x_sum + on_minus_off * x_tgt)


def _pick_row_tile(n, c, itemsize, min_rows):
    """Largest row tile fitting a ~4 MiB single-buffer budget (double-buffered by
    BlockSpec), aligned to min_rows; if N fits in one tile, use the full extent."""
    budget = 4 * 1024 * 1024
    rt = max(min_rows, min(1024, budget // max(1, c * itemsize)))
    rt = max(min_rows, (rt // min_rows) * min_rows)
    if n <= rt:
        return n                      # single full-extent block (always a legal block dim)
    return rt                         # multiple of min_rows; ragged last block is masked


@functools.partial(jax.jit, static_argnames=("smoothing", "row_tile"))
def label_smooth_loss(logits, target, smoothing=0.1, row_tile=None):
    """logits: (..., C) float (f32/bf16); target: (...,) int. Returns scalar f32 loss."""
    C = logits.shape[-1]
    logits2d = logits.reshape(-1, C)                          # flatten leading dims (free)
    N = logits2d.shape[0]
    tgt2d = target.reshape(-1).astype(jnp.int32).reshape(N, 1)

    itemsize = jnp.dtype(logits.dtype).itemsize
    min_rows = 16 if itemsize < 4 else 8

    if row_tile is None:
        row_tile = _pick_row_tile(N, C, itemsize, min_rows)
    else:
        row_tile = min(int(row_tile), N)
        assert row_tile == N or row_tile % min_rows == 0, (
            "row_tile must be a multiple of %d (or >= N)" % min_rows)

    kernel = functools.partial(_label_smooth_kernel, smoothing=float(smoothing))

    per_row = pl.pallas_call(
        kernel,
        out_shape=jax.ShapeDtypeStruct((N, 1), jnp.float32),
        grid_spec=pltpu.PrefetchScalarGridSpec(
            num_scalar_prefetch=0,
            grid=(pl.cdiv(N, row_tile),),
            in_specs=[
                pl.BlockSpec((row_tile, C), lambda i: (i, 0)),
                pl.BlockSpec((row_tile, 1), lambda i: (i, 0)),
            ],
            out_specs=pl.BlockSpec((row_tile, 1), lambda i: (i, 0)),
        ),
        compiler_params=pltpu.CompilerParams(
            dimension_semantics=("parallel",),   # no carried state -> megacore-friendly
            vmem_limit_bytes=48 * 1024 * 1024,   # headroom even on v7x (64 MiB physical)
        ),
    )(logits2d, tgt2d)

    # Tiny final reduction in plain JAX (N floats).
    return jnp.sum(per_row[:, 0]) / jnp.float32(N)


def _reference(logits, target, smoothing):
    """Pure-JAX reference mirroring the PyTorch module."""
    logits = logits.astype(jnp.float32)
    C = logits.shape[-1]
    log_prob = jax.nn.log_softmax(logits, axis=-1)
    weight = jnp.full(logits.shape, smoothing / (C - 1.0), jnp.float32)
    onehot = jax.nn.one_hot(target, C, dtype=jnp.float32)
    weight = weight * (1.0 - onehot) + onehot * (1.0 - smoothing)
    return jnp.mean(jnp.sum(-weight * log_prob, axis=-1))


if __name__ == "__main__":
    key = jax.random.PRNGKey(0)
    smoothing = 0.1

    def check(logits, target, **kw):
        loss = jax.block_until_ready(
            label_smooth_loss(logits, target, smoothing=smoothing, **kw))
        ref = _reference(logits, target, smoothing)
        assert jnp.allclose(loss, ref, rtol=2e-5, atol=2e-5), (loss, ref)

    # Case 1: small f32 problem (single full-extent tile).
    k1, k2, key = jax.random.split(key, 3)
    logits = jax.random.normal(k1, (8, 32), dtype=jnp.float32)
    target = jax.random.randint(k2, (8,), 0, 32, dtype=jnp.int32)
    check(logits, target)

    # Case 2: bf16 logits (native-dtype HBM traffic, f32 math in VMEM).
    k1, k2, key = jax.random.split(key, 3)
    logits = jax.random.normal(k1, (64, 256), dtype=jnp.float32).astype(jnp.bfloat16)
    target = jax.random.randint(k2, (64,), 0, 256, dtype=jnp.int32)
    check(logits, target)

    # Case 3: multi-tile grid with explicit row_tile (parallel grid axis).
    k1, k2, key = jax.random.split(key, 3)
    logits = jax.random.normal(k1, (48, 128), dtype=jnp.float32)
    target = jax.random.randint(k2, (48,), 0, 128, dtype=jnp.int32)
    check(logits, target, row_tile=16)

    # Case 4: N not a multiple of 8 (single full-extent block, no padding).
    k1, k2, key = jax.random.split(key, 3)
    logits = jax.random.normal(k1, (10, 32), dtype=jnp.float32)
    target = jax.random.randint(k2, (10,), 0, 32, dtype=jnp.int32)
    check(logits, target)

    # Case 5: ragged multi-tile grid (last block partial, masked store, no pad copy).
    k1, k2, key = jax.random.split(key, 3)
    logits = jax.random.normal(k1, (40, 64), dtype=jnp.float32)
    target = jax.random.randint(k2, (40,), 0, 64, dtype=jnp.int32)
    check(logits, target, row_tile=16)

    # Case 6: 3-D input (B, T, C) with (B, T) targets — leading dims flattened.
    k1, k2, key = jax.random.split(key, 3)
    logits = jax.random.normal(k1, (2, 8, 32), dtype=jnp.float32)
    target = jax.random.randint(k2, (2, 8), 0, 32, dtype=jnp.int32)
    check(logits, target)

    print("KERNEL_OK")
</pallas_src>

<mosaic_0001>
module attributes {stable_mosaic.version = 11 : i64} {
  func.func @_label_smooth_kernel(%arg0: i32, %arg1: memref<8x32xf32, #tpu.memory_space<vmem>>, %arg2: memref<8x1xi32, #tpu.memory_space<vmem>>, %arg3: memref<8x1xf32, #tpu.memory_space<vmem>>) attributes {dimension_semantics = [#tpu.dimension_semantics<parallel>], iteration_bounds = array<i64: 1>, scalar_prefetch = 0 : i64, scratch_operands = 0 : i64, tpu.core_type = #tpu.core_type<tc>, window_params = [{transform_indices = @transform_0, window_bounds = array<i64: 8, 32>}, {transform_indices = @transform_1, window_bounds = array<i64: 8, 1>}, {transform_indices = @transform_2, window_bounds = array<i64: 8, 1>}]} {
    %c0 = arith.constant 0 : index
    %c0_0 = arith.constant 0 : index
    %0 = vector.load %arg1[%c0, %c0_0] : memref<8x32xf32, #tpu.memory_space<vmem>>, vector<8x32xf32>
    %c0_1 = arith.constant 0 : index
    %c0_2 = arith.constant 0 : index
    %1 = vector.load %arg2[%c0_1, %c0_2] : memref<8x1xi32, #tpu.memory_space<vmem>>, vector<8x1xi32>
    %cst = arith.constant dense<0xFF800000> : vector<8xf32>
    %2 = vector.multi_reduction <maximumf>, %0, %cst [1] : vector<8x32xf32> to vector<8xf32>
    %3 = vector.shape_cast %2 : vector<8xf32> to vector<8x1xf32>
    %4 = vector.broadcast %3 : vector<8x1xf32> to vector<8x32xf32>
    %5 = arith.subf %0, %4 : vector<8x32xf32>
    %6 = math.exp %5 : vector<8x32xf32>
    %cst_3 = arith.constant dense<0.000000e+00> : vector<8xf32>
    %7 = vector.multi_reduction <add>, %6, %cst_3 [1] : vector<8x32xf32> to vector<8xf32>
    %8 = vector.shape_cast %7 : vector<8xf32> to vector<8x1xf32>
    %9 = math.log %8 : vector<8x1xf32>
    %10 = tpu.iota {dimensions = array<i32: 1>} : vector<8x32xi32>
    %11 = vector.broadcast %1 : vector<8x1xi32> to vector<8x32xi32>
    %12 = arith.cmpi eq, %10, %11 : vector<8x32xi32>
    %cst_4 = arith.constant 0.000000e+00 : f32
    %13 = vector.broadcast %cst_4 : f32 to vector<8x32xf32>
    %14 = arith.select %12, %0, %13 : vector<8x32xi1>, vector<8x32xf32>
    %cst_5 = arith.constant dense<0.000000e+00> : vector<8xf32>
    %15 = vector.multi_reduction <add>, %14, %cst_5 [1] : vector<8x32xf32> to vector<8xf32>
    %16 = vector.shape_cast %15 : vector<8xf32> to vector<8x1xf32>
    %cst_6 = arith.constant dense<0.000000e+00> : vector<8xf32>
    %17 = vector.multi_reduction <add>, %0, %cst_6 [1] : vector<8x32xf32> to vector<8xf32>
    %18 = vector.shape_cast %17 : vector<8xf32> to vector<8x1xf32>
    %19 = arith.addf %3, %9 : vector<8x1xf32>
    %cst_7 = arith.constant 0.0032258064 : f32
    %20 = vector.broadcast %cst_7 : f32 to vector<8x1xf32>
    %21 = arith.mulf %20, %18 : vector<8x1xf32>
    %cst_8 = arith.constant 0.896774172 : f32
    %22 = vector.broadcast %cst_8 : f32 to vector<8x1xf32>
    %23 = arith.mulf %22, %16 : vector<8x1xf32>
    %24 = arith.addf %21, %23 : vector<8x1xf32>
    %25 = arith.subf %19, %24 : vector<8x1xf32>
    %c0_9 = arith.constant 0 : index
    %c0_10 = arith.constant 0 : index
    %26 = vector.load %arg3[%c0_9, %c0_10] : memref<8x1xf32, #tpu.memory_space<vmem>>, vector<8x1xf32>
    tpu.vector_store %arg3[%c0_9, %c0_10], %25 {strides = array<i32>} : memref<8x1xf32, #tpu.memory_space<vmem>>, vector<8x1xf32>,
    return
  }
  func.func @transform_0(%arg0: i32) -> (i32, i32) {
    %c0_i32 = arith.constant 0 : i32
    %c0_i32_0 = arith.constant 0 : i32
    return %arg0, %c0_i32 : i32, i32
  }
  func.func @transform_1(%arg0: i32) -> (i32, i32) {
    %c0_i32 = arith.constant 0 : i32
    %c0_i32_0 = arith.constant 0 : i32
    return %arg0, %c0_i32 : i32, i32
  }
  func.func @transform_2(%arg0: i32) -> (i32, i32) {
    %c0_i32 = arith.constant 0 : i32
    %c0_i32_0 = arith.constant 0 : i32
    return %arg0, %c0_i32 : i32, i32
  }
}

</mosaic_0001>

<llo_original>
// kernel: label_smooth_loss.1
$region0: #{label_smooth_loss.1}
  #allocation0 [shape = 'u32[]', space=smem, size = 0x4, offset = 0x4, fixed_abs, tag = 'smem constant byte address 0x4 - core index']
  #allocation1 [shape = 'u32[144,128]{1,0:T(1,128)}', space=vmem, size = 0x12000, scoped, tag = 'internal scratch']
  %s0 = inlined_call_operand.vmem [shape: f32[8,32], index: 0, kind: input, shape index: {}]
  %s1 = inlined_call_operand.vmem [shape: s32[8,1], index: 1, kind: input, shape index: {}]
  %s2 = inlined_call_operand.vmem [shape: f32[8,1], index: 2, kind: output, shape index: {}]
  %s3 = sld [smem:[#allocation0]]
  $region18: #{label_smooth_loss.1} parent=0
    _
  %s5 = ssub.s32 1, %s3
  %s6 = scalar_select 0, %s5, %s3
  // Predicated region
  $region2: #{label_smooth_loss.1} parent=0 // pred_check
    _
  $region3: #{label_smooth_loss.1} parent=0 // pred_check_branch
    %8 = sbr.rel (0) target = $region5
  $region4: #{label_smooth_loss.1} parent=0 // pred_region
    _
  $region5: #{label_smooth_loss.1} parent=0 // pred_fallthru
    _
  // Predicated region
  $region6: #{label_smooth_loss.1} parent=0 // pred_check
    _
  $region7: #{label_smooth_loss.1} parent=0 // pred_check_branch
    %10 = sbr.rel (0) target = $region9
  $region8: #{label_smooth_loss.1} parent=0 // pred_region
    _
  $region9: #{label_smooth_loss.1} parent=0 // pred_fallthru
    _
  %v11 = vld [vmem:[%s0] sm:$0xff]
  %v12 = vld [vmem:[%s1] sm:$0xff]
  %vm13 = vcmask 261120
  %v14 = vsel %vm13, %v11, -inf
  %15 = vmax.xlane.f32.xlu0 %v14
  %v16 = vpop.xlane.xlu0 %15
  %v17 = vsub.f32 %v11, %v16
  %v18 = vmul.f32 %v17, 1.442695
  %v19 = vpow.pop %v18
  %v20 = vsel %vm13, %v19, 0.0
  %21 = vadd.xlane.f32.xlu0 %v20
  %v22 = vpop.xlane.xlu0 %21
  %v23 = vlog2.pop %v22
  %v24 = vmul.f32 %v23, 0.6931472
  %v25 = vlaneseq
  %v26 = vand.u32 %v25, 127
  %27 = vset.pattern.permute.xlu0 0
  %28 = vperm.xlu0 %27, %v12
  %v29 = vpop.permute.xlu0 %28
  %vm30 = vcmp.eq.s32.totalorder %v26, %v29
  %v31 = vsel %vm30, %v11, 0.0
  %v32 = vsel %vm13, %v31, 0.0
  %33 = vadd.xlane.f32.xlu0 %v32
  %v34 = vpop.xlane.xlu0 %33
  %v35 = vsel %vm13, %v11, 0.0
  %36 = vadd.xlane.f32.xlu0 %v35
  %v37 = vpop.xlane.xlu0 %36
  %v38 = vadd.f32 %v16, %v24
  %v39 = vmul.f32 %v37, 0.0032258064
  %v40 = vmul.f32 %v34, 0.8967742
  %v41 = vadd.f32 %v39, %v40
  %v42 = vsub.f32 %v38, %v41
  %vm43 = vcmask 7168
  %44 = vst.msk [vmem:[%s2] sm:$0xff] %vm43, %v42
  // Predicated region
  $region10: #{label_smooth_loss.1} parent=0 // pred_check
    _
  $region11: #{label_smooth_loss.1} parent=0 // pred_check_branch
    %46 = sbr.rel (0) target = $region13
  $region12: #{label_smooth_loss.1} parent=0 // pred_region
    _
  $region13: #{label_smooth_loss.1} parent=0 // pred_fallthru
    _
  // Predicated region
  $region14: #{label_smooth_loss.1} parent=0 // pred_check
    _
  $region15: #{label_smooth_loss.1} parent=0 // pred_check_branch
    %48 = sbr.rel (0) target = $region17
  $region16: #{label_smooth_loss.1} parent=0 // pred_region
    _
  $region17: #{label_smooth_loss.1} parent=0 // pred_fallthru
    _

</llo_original>
